<compile_context>
chip_gen: v5e
topology: v5e:2x2
jax: 0.10.0
libtpu: 0.0.40
codegen_flags: <defaults>
</compile_context>

<pallas_src>
import functools

import jax
import jax.numpy as jnp
from jax.experimental import pallas as pl
from jax.experimental.pallas import tpu as pltpu


def _round_up(x, m):
    return (x + m - 1) // m * m


def _conv3x3_relu_kernel(x_ref, w_ref, b_ref, o_ref, *, wp, lv):
    """One (image, c_out-tile) step of y = relu(conv3x3(x) + b).

    x_ref: (c_in_p, l_ext)  zero-padded image plane, flattened row-major
    w_ref: (9, tn, c_in_p)  per-tap weight matrices, tap index = 3*dy + dx
    b_ref: (tn, 1)
    o_ref: (tn, lv)         lv = H * (W + 2); spatial axis is lane-dense
    """
    acc = jnp.zeros(o_ref.shape, jnp.float32)
    for dy in range(3):
        for dx in range(3):
            # Output flat index q reads input flat index q + off for tap (dy, dx).
            off = (dy + 1) * wp + (dx - 1)
            x_slab = x_ref[:, off:off + lv]              # (c_in_p, lv)
            acc = acc + jnp.dot(w_ref[3 * dy + dx], x_slab,
                                preferred_element_type=jnp.float32)
    acc = acc + b_ref[...]                               # bias (broadcast over lanes)
    o_ref[...] = jnp.maximum(acc, 0.0).astype(o_ref.dtype)   # ReLU


@jax.jit
def conv3x3_relu(x_nchw, weight, bias):
    """Forward of Conv(in, out, norm='none'): relu(conv2d(x, W, b, k=3, pad=1)).

    x_nchw: (N, C_in, H, W)
    weight: (C_out, C_in, 3, 3)   (PyTorch OIHW layout)
    bias:   (C_out,)
    returns (N, C_out, H, W)
    """
    n, c_in, h, w = x_nchw.shape
    c_out = weight.shape[0]

    wp = w + 2                      # width with 1 pad column each side
    l_v = h * wp                    # output plane length (cols 0 and wp-1 are junk)
    l_ext = (h + 4) * wp            # padded + extended input plane length

    # Channel padding to sublane multiples (8); tile c_out if it is very large.
    c_in_p = _round_up(c_in, 8)
    c_out_p = _round_up(c_out, 8)
    tn = c_out_p if c_out_p <= 256 else 256
    c_out_p = _round_up(c_out_p, tn)

    # Single pad op: channels -> c_in_p, H by 2 rows each side, W by 1 col each
    # side (the extra H rows keep every tap's flat offset in-bounds).
    xp = jnp.pad(x_nchw, ((0, 0), (0, c_in_p - c_in), (2, 2), (1, 1)))
    x_flat = xp.reshape(n, c_in_p, l_ext)

    # Weight -> (9, c_out_p, c_in_p): one (C_out, C_in) matrix per tap.
    w_pad = jnp.pad(weight, ((0, c_out_p - c_out), (0, c_in_p - c_in), (0, 0), (0, 0)))
    w_mat = jnp.transpose(w_pad, (2, 3, 0, 1)).reshape(9, c_out_p, c_in_p)
    b_col = jnp.pad(bias, (0, c_out_p - c_out)).reshape(c_out_p, 1)

    itemsize = jnp.dtype(x_nchw.dtype).itemsize
    block_bytes = (2 * (c_in_p * l_ext + tn * l_v) * itemsize
                   + 2 * (9 * tn * c_in_p + tn) * itemsize)
    vmem_limit = int(min(64 * 2**20, max(32 * 2**20, 2 * block_bytes)))
    # TODO(synk): for very large H*W (whole-plane block approaching VMEM) add
    # row tiling with a halo via manual DMA; unnecessary at these sizes.

    grid = (n, c_out_p // tn)
    y_flat = pl.pallas_call(
        functools.partial(_conv3x3_relu_kernel, wp=wp, lv=l_v),
        out_shape=jax.ShapeDtypeStruct((n, c_out_p, l_v), x_nchw.dtype),
        grid_spec=pltpu.PrefetchScalarGridSpec(
            num_scalar_prefetch=0,
            grid=grid,
            in_specs=[
                pl.BlockSpec((None, c_in_p, l_ext), lambda b, j: (b, 0, 0)),
                pl.BlockSpec((9, tn, c_in_p), lambda b, j: (0, j, 0)),
                pl.BlockSpec((tn, 1), lambda b, j: (j, 0)),
            ],
            out_specs=pl.BlockSpec((None, tn, l_v), lambda b, j: (b, j, 0)),
        ),
        compiler_params=pltpu.CompilerParams(
            dimension_semantics=("parallel", "parallel"),
            vmem_limit_bytes=vmem_limit,
        ),
    )(x_flat, w_mat, b_col)

    # Drop channel padding and the two junk pad columns; still NCHW.
    y = y_flat.reshape(n, c_out_p, h, wp)
    return y[:, :c_out, :, 1:w + 1]


if __name__ == "__main__":
    # Conv(in_channels=4, out_channels=8) with norm='none' (mid = out).
    key = jax.random.PRNGKey(0)
    kx, kw, kb = jax.random.split(key, 3)

    N, C_IN, C_OUT, H, W = 2, 4, 8, 16, 16

    x = jax.random.normal(kx, (N, C_IN, H, W), dtype=jnp.float32)
    bound = 1.0 / (C_IN * 9) ** 0.5
    weight = jax.random.uniform(kw, (C_OUT, C_IN, 3, 3), jnp.float32, -bound, bound)
    bias = jax.random.uniform(kb, (C_OUT,), jnp.float32, -bound, bound)

    y = conv3x3_relu(x, weight, bias)
    jax.block_until_ready(y)

    # Reference: XLA conv (full-precision) + bias + ReLU.
    y_ref = jax.lax.conv_general_dilated(
        x, weight, window_strides=(1, 1), padding=((1, 1), (1, 1)),
        dimension_numbers=("NCHW", "OIHW", "NCHW"),
        precision=jax.lax.Precision.HIGHEST)
    y_ref = jnp.maximum(y_ref + bias[None, :, None, None], 0.0)

    assert y.shape == (N, C_OUT, H, W)
    assert jnp.allclose(y, y_ref, atol=1e-3, rtol=1e-3), "mismatch vs reference"

    print("KERNEL_OK")
</pallas_src>

<mosaic_0001>
module attributes {stable_mosaic.version = 11 : i64} {
  func.func @_conv3x3_relu_kernel(%arg0: i32, %arg1: i32, %arg2: memref<1x8x360xf32, #tpu.memory_space<vmem>>, %arg3: memref<9x8x8xf32, #tpu.memory_space<vmem>>, %arg4: memref<8x1xf32, #tpu.memory_space<vmem>>, %arg5: memref<1x8x288xf32, #tpu.memory_space<vmem>>) attributes {dimension_semantics = [#tpu.dimension_semantics<parallel>, #tpu.dimension_semantics<parallel>], iteration_bounds = array<i64: 2, 1>, scalar_prefetch = 0 : i64, scratch_operands = 0 : i64, tpu.core_type = #tpu.core_type<tc>, window_params = [{transform_indices = @transform_0, window_bounds = array<i64: 1, 8, 360>}, {transform_indices = @transform_1, window_bounds = array<i64: 9, 8, 8>}, {transform_indices = @transform_2, window_bounds = array<i64: 8, 1>}, {transform_indices = @transform_3, window_bounds = array<i64: 1, 8, 288>}]} {
    %cst = arith.constant 0.000000e+00 : f32
    %0 = vector.broadcast %cst : f32 to vector<8x288xf32>
    %c0 = arith.constant 0 : index
    %c0_0 = arith.constant 0 : index
    %c17 = arith.constant 17 : index
    %1 = vector.load %arg2[%c0, %c0_0, %c17] : memref<1x8x360xf32, #tpu.memory_space<vmem>>, vector<1x8x288xf32>
    %2 = vector.shape_cast %1 : vector<1x8x288xf32> to vector<8x288xf32>
    %c0_1 = arith.constant 0 : index
    %c0_2 = arith.constant 0 : index
    %c0_3 = arith.constant 0 : index
    %3 = vector.load %arg3[%c0_1, %c0_2, %c0_3] : memref<9x8x8xf32, #tpu.memory_space<vmem>>, vector<1x8x8xf32>
    %4 = vector.shape_cast %3 : vector<1x8x8xf32> to vector<8x8xf32>
    %cst_4 = arith.constant dense<0.000000e+00> : vector<8x288xf32>
    %5 = tpu.matmul %4, %2, %cst_4 {dimension_numbers = #tpu.dot_dimension_numbers<[1], [0], [0], [1], [0, 0, 1, 1], [], []>} : vector<8x8xf32>, vector<8x288xf32>, vector<8x288xf32> -> vector<8x288xf32>
    %6 = arith.addf %0, %5 : vector<8x288xf32>
    %c0_5 = arith.constant 0 : index
    %c0_6 = arith.constant 0 : index
    %c18 = arith.constant 18 : index
    %7 = vector.load %arg2[%c0_5, %c0_6, %c18] : memref<1x8x360xf32, #tpu.memory_space<vmem>>, vector<1x8x288xf32>
    %8 = vector.shape_cast %7 : vector<1x8x288xf32> to vector<8x288xf32>
    %c1 = arith.constant 1 : index
    %c0_7 = arith.constant 0 : index
    %c0_8 = arith.constant 0 : index
    %9 = vector.load %arg3[%c1, %c0_7, %c0_8] : memref<9x8x8xf32, #tpu.memory_space<vmem>>, vector<1x8x8xf32>
    %10 = vector.shape_cast %9 : vector<1x8x8xf32> to vector<8x8xf32>
    %cst_9 = arith.constant dense<0.000000e+00> : vector<8x288xf32>
    %11 = tpu.matmul %10, %8, %cst_9 {dimension_numbers = #tpu.dot_dimension_numbers<[1], [0], [0], [1], [0, 0, 1, 1], [], []>} : vector<8x8xf32>, vector<8x288xf32>, vector<8x288xf32> -> vector<8x288xf32>
    %12 = arith.addf %6, %11 : vector<8x288xf32>
    %c0_10 = arith.constant 0 : index
    %c0_11 = arith.constant 0 : index
    %c19 = arith.constant 19 : index
    %13 = vector.load %arg2[%c0_10, %c0_11, %c19] : memref<1x8x360xf32, #tpu.memory_space<vmem>>, vector<1x8x288xf32>
    %14 = vector.shape_cast %13 : vector<1x8x288xf32> to vector<8x288xf32>
    %c2 = arith.constant 2 : index
    %c0_12 = arith.constant 0 : index
    %c0_13 = arith.constant 0 : index
    %15 = vector.load %arg3[%c2, %c0_12, %c0_13] : memref<9x8x8xf32, #tpu.memory_space<vmem>>, vector<1x8x8xf32>
    %16 = vector.shape_cast %15 : vector<1x8x8xf32> to vector<8x8xf32>
    %cst_14 = arith.constant dense<0.000000e+00> : vector<8x288xf32>
    %17 = tpu.matmul %16, %14, %cst_14 {dimension_numbers = #tpu.dot_dimension_numbers<[1], [0], [0], [1], [0, 0, 1, 1], [], []>} : vector<8x8xf32>, vector<8x288xf32>, vector<8x288xf32> -> vector<8x288xf32>
    %18 = arith.addf %12, %17 : vector<8x288xf32>
    %c0_15 = arith.constant 0 : index
    %c0_16 = arith.constant 0 : index
    %c35 = arith.constant 35 : index
    %19 = vector.load %arg2[%c0_15, %c0_16, %c35] : memref<1x8x360xf32, #tpu.memory_space<vmem>>, vector<1x8x288xf32>
    %20 = vector.shape_cast %19 : vector<1x8x288xf32> to vector<8x288xf32>
    %c3 = arith.constant 3 : index
    %c0_17 = arith.constant 0 : index
    %c0_18 = arith.constant 0 : index
    %21 = vector.load %arg3[%c3, %c0_17, %c0_18] : memref<9x8x8xf32, #tpu.memory_space<vmem>>, vector<1x8x8xf32>
    %22 = vector.shape_cast %21 : vector<1x8x8xf32> to vector<8x8xf32>
    %cst_19 = arith.constant dense<0.000000e+00> : vector<8x288xf32>
    %23 = tpu.matmul %22, %20, %cst_19 {dimension_numbers = #tpu.dot_dimension_numbers<[1], [0], [0], [1], [0, 0, 1, 1], [], []>} : vector<8x8xf32>, vector<8x288xf32>, vector<8x288xf32> -> vector<8x288xf32>
    %24 = arith.addf %18, %23 : vector<8x288xf32>
    %c0_20 = arith.constant 0 : index
    %c0_21 = arith.constant 0 : index
    %c36 = arith.constant 36 : index
    %25 = vector.load %arg2[%c0_20, %c0_21, %c36] : memref<1x8x360xf32, #tpu.memory_space<vmem>>, vector<1x8x288xf32>
    %26 = vector.shape_cast %25 : vector<1x8x288xf32> to vector<8x288xf32>
    %c4 = arith.constant 4 : index
    %c0_22 = arith.constant 0 : index
    %c0_23 = arith.constant 0 : index
    %27 = vector.load %arg3[%c4, %c0_22, %c0_23] : memref<9x8x8xf32, #tpu.memory_space<vmem>>, vector<1x8x8xf32>
    %28 = vector.shape_cast %27 : vector<1x8x8xf32> to vector<8x8xf32>
    %cst_24 = arith.constant dense<0.000000e+00> : vector<8x288xf32>
    %29 = tpu.matmul %28, %26, %cst_24 {dimension_numbers = #tpu.dot_dimension_numbers<[1], [0], [0], [1], [0, 0, 1, 1], [], []>} : vector<8x8xf32>, vector<8x288xf32>, vector<8x288xf32> -> vector<8x288xf32>
    %30 = arith.addf %24, %29 : vector<8x288xf32>
    %c0_25 = arith.constant 0 : index
    %c0_26 = arith.constant 0 : index
    %c37 = arith.constant 37 : index
    %31 = vector.load %arg2[%c0_25, %c0_26, %c37] : memref<1x8x360xf32, #tpu.memory_space<vmem>>, vector<1x8x288xf32>
    %32 = vector.shape_cast %31 : vector<1x8x288xf32> to vector<8x288xf32>
    %c5 = arith.constant 5 : index
    %c0_27 = arith.constant 0 : index
    %c0_28 = arith.constant 0 : index
    %33 = vector.load %arg3[%c5, %c0_27, %c0_28] : memref<9x8x8xf32, #tpu.memory_space<vmem>>, vector<1x8x8xf32>
    %34 = vector.shape_cast %33 : vector<1x8x8xf32> to vector<8x8xf32>
    %cst_29 = arith.constant dense<0.000000e+00> : vector<8x288xf32>
    %35 = tpu.matmul %34, %32, %cst_29 {dimension_numbers = #tpu.dot_dimension_numbers<[1], [0], [0], [1], [0, 0, 1, 1], [], []>} : vector<8x8xf32>, vector<8x288xf32>, vector<8x288xf32> -> vector<8x288xf32>
    %36 = arith.addf %30, %35 : vector<8x288xf32>
    %c0_30 = arith.constant 0 : index
    %c0_31 = arith.constant 0 : index
    %c53 = arith.constant 53 : index
    %37 = vector.load %arg2[%c0_30, %c0_31, %c53] : memref<1x8x360xf32, #tpu.memory_space<vmem>>, vector<1x8x288xf32>
    %38 = vector.shape_cast %37 : vector<1x8x288xf32> to vector<8x288xf32>
    %c6 = arith.constant 6 : index
    %c0_32 = arith.constant 0 : index
    %c0_33 = arith.constant 0 : index
    %39 = vector.load %arg3[%c6, %c0_32, %c0_33] : memref<9x8x8xf32, #tpu.memory_space<vmem>>, vector<1x8x8xf32>
    %40 = vector.shape_cast %39 : vector<1x8x8xf32> to vector<8x8xf32>
    %cst_34 = arith.constant dense<0.000000e+00> : vector<8x288xf32>
    %41 = tpu.matmul %40, %38, %cst_34 {dimension_numbers = #tpu.dot_dimension_numbers<[1], [0], [0], [1], [0, 0, 1, 1], [], []>} : vector<8x8xf32>, vector<8x288xf32>, vector<8x288xf32> -> vector<8x288xf32>
    %42 = arith.addf %36, %41 : vector<8x288xf32>
    %c0_35 = arith.constant 0 : index
    %c0_36 = arith.constant 0 : index
    %c54 = arith.constant 54 : index
    %43 = vector.load %arg2[%c0_35, %c0_36, %c54] : memref<1x8x360xf32, #tpu.memory_space<vmem>>, vector<1x8x288xf32>
    %44 = vector.shape_cast %43 : vector<1x8x288xf32> to vector<8x288xf32>
    %c7 = arith.constant 7 : index
    %c0_37 = arith.constant 0 : index
    %c0_38 = arith.constant 0 : index
    %45 = vector.load %arg3[%c7, %c0_37, %c0_38] : memref<9x8x8xf32, #tpu.memory_space<vmem>>, vector<1x8x8xf32>
    %46 = vector.shape_cast %45 : vector<1x8x8xf32> to vector<8x8xf32>
    %cst_39 = arith.constant dense<0.000000e+00> : vector<8x288xf32>
    %47 = tpu.matmul %46, %44, %cst_39 {dimension_numbers = #tpu.dot_dimension_numbers<[1], [0], [0], [1], [0, 0, 1, 1], [], []>} : vector<8x8xf32>, vector<8x288xf32>, vector<8x288xf32> -> vector<8x288xf32>
    %48 = arith.addf %42, %47 : vector<8x288xf32>
    %c0_40 = arith.constant 0 : index
    %c0_41 = arith.constant 0 : index
    %c55 = arith.constant 55 : index
    %49 = vector.load %arg2[%c0_40, %c0_41, %c55] : memref<1x8x360xf32, #tpu.memory_space<vmem>>, vector<1x8x288xf32>
    %50 = vector.shape_cast %49 : vector<1x8x288xf32> to vector<8x288xf32>
    %c8 = arith.constant 8 : index
    %c0_42 = arith.constant 0 : index
    %c0_43 = arith.constant 0 : index
    %51 = vector.load %arg3[%c8, %c0_42, %c0_43] : memref<9x8x8xf32, #tpu.memory_space<vmem>>, vector<1x8x8xf32>
    %52 = vector.shape_cast %51 : vector<1x8x8xf32> to vector<8x8xf32>
    %cst_44 = arith.constant dense<0.000000e+00> : vector<8x288xf32>
    %53 = tpu.matmul %52, %50, %cst_44 {dimension_numbers = #tpu.dot_dimension_numbers<[1], [0], [0], [1], [0, 0, 1, 1], [], []>} : vector<8x8xf32>, vector<8x288xf32>, vector<8x288xf32> -> vector<8x288xf32>
    %54 = arith.addf %48, %53 : vector<8x288xf32>
    %c0_45 = arith.constant 0 : index
    %c0_46 = arith.constant 0 : index
    %55 = vector.load %arg4[%c0_45, %c0_46] : memref<8x1xf32, #tpu.memory_space<vmem>>, vector<8x1xf32>
    %56 = vector.broadcast %55 : vector<8x1xf32> to vector<8x288xf32>
    %57 = arith.addf %54, %56 : vector<8x288xf32>
    %cst_47 = arith.constant 0.000000e+00 : f32
    %58 = vector.broadcast %cst_47 : f32 to vector<8x288xf32>
    %59 = arith.maximumf %57, %58 : vector<8x288xf32>
    %c0_48 = arith.constant 0 : index
    %c0_49 = arith.constant 0 : index
    %c0_50 = arith.constant 0 : index
    %60 = vector.load %arg5[%c0_48, %c0_49, %c0_50] : memref<1x8x288xf32, #tpu.memory_space<vmem>>, vector<1x8x288xf32>
    %61 = vector.shape_cast %60 : vector<1x8x288xf32> to vector<8x288xf32>
    %62 = vector.shape_cast %59 : vector<8x288xf32> to vector<1x8x288xf32>
    tpu.vector_store %arg5[%c0_48, %c0_49, %c0_50], %62 {strides = array<i32>} : memref<1x8x288xf32, #tpu.memory_space<vmem>>, vector<1x8x288xf32>,
    return
  }
  func.func @transform_0(%arg0: i32, %arg1: i32) -> (i32, i32, i32) {
    %c0_i32 = arith.constant 0 : i32
    %c0_i32_0 = arith.constant 0 : i32
    %c0_i32_1 = arith.constant 0 : i32
    return %arg0, %c0_i32, %c0_i32_0 : i32, i32, i32
  }
  func.func @transform_1(%arg0: i32, %arg1: i32) -> (i32, i32, i32) {
    %c0_i32 = arith.constant 0 : i32
    %c0_i32_0 = arith.constant 0 : i32
    %c0_i32_1 = arith.constant 0 : i32
    return %c0_i32, %arg1, %c0_i32_0 : i32, i32, i32
  }
  func.func @transform_2(%arg0: i32, %arg1: i32) -> (i32, i32) {
    %c0_i32 = arith.constant 0 : i32
    %c0_i32_0 = arith.constant 0 : i32
    return %arg1, %c0_i32 : i32, i32
  }
  func.func @transform_3(%arg0: i32, %arg1: i32) -> (i32, i32, i32) {
    %c0_i32 = arith.constant 0 : i32
    %c0_i32_0 = arith.constant 0 : i32
    return %arg0, %arg1, %c0_i32 : i32, i32, i32
  }
}

</mosaic_0001>

<llo_original>
// kernel: conv3x3_relu.1
$region0: #{conv3x3_relu.1}
  #allocation0 [shape = 'u32[]', space=smem, size = 0x4, offset = 0x4, fixed_abs, tag = 'smem constant byte address 0x4 - core index']
  #allocation1 [shape = 'u32[72,128]{1,0:T(1,128)}', space=vmem, size = 0x9000, scoped, tag = 'internal scratch']
  %s0 = inlined_call_operand.vmem [shape: f32[2,8,360], index: 0, kind: input, shape index: {}]
  %s1 = inlined_call_operand.vmem [shape: f32[9,8,8], index: 1, kind: input, shape index: {}]
  %s2 = inlined_call_operand.vmem [shape: f32[8,1], index: 2, kind: input, shape index: {}]
  %s3 = inlined_call_operand.vmem [shape: f32[2,8,288], index: 3, kind: output, shape index: {}]
  %s4 = sld [smem:[#allocation0]]
  $region45: #{conv3x3_relu.1} parent=0
    _
  %s6 = ssub.s32 1, %s4
  %s7 = scalar_select 0, %s6, %s4
  loop: start=0, step=1, limit=4
  $region2: #{conv3x3_relu.1} parent=0 // loop_pre_header
    _
  $region3: #{conv3x3_relu.1} parent=0 // loop_header
    %s9 = sphi 0, %s13
    %p10 = scmp.ge.s32.totalorder %s9, 4
    %s16 = sphi 0, %s28
    %s17 = sphi 0, %s24
    %s18 = sphi 0, %s16
    %s19 = sphi 0, %s17
    %s20 = sphi 0, %s18
    %s21 = sphi 0, %s19
    %s31 = sphi 0, %s33
    %s34 = sphi 0, %s31
    %s35 = sphi 0, %s34
    %s51 = sphi 0, %s35
    %s57 = sphi 0, %s59
    %s60 = sphi 0, %s57
    %s61 = sphi 0, %s60
    %s77 = sphi 0, %s61
    %s83 = sphi 0, %s85
    %s86 = sphi 0, %s83
    %s87 = sphi 0, %s86
    %s103 = sphi 0, %s87
    %s111 = sphi 0, %s113
    %s114 = sphi 0, %s111
    %s115 = sphi 0, %s114
    %s131 = sphi 0, %s115
  $region4: #{conv3x3_relu.1} parent=0 // loop_header_branch
    %12 = sbr.rel (%p10) target = $region8
  $region5: #{conv3x3_relu.1} parent=0 // loop_body
    %s14 = ssub.s32 %s9, 1
    %s15 = ssub.s32 %s9, 2
    %s22 = sadd.s32 1, %s17
    %p23 = scmp.ge.s32.totalorder %s22, 1
    %s24 = scalar_select %p23, 0, %s22
    %s25 = sadd.s32 1, %s16
    %s26 = scalar_select %p23, %s25, %s16
    %p27 = scmp.ge.s32.totalorder %s26, 2
    %s28 = scalar_select %p27, 0, %s26
    %s29 = ssub.s32 %s16, %s28
    %p30 = scmp.eq.s32.totalorder %s29, 0
    %s32 = sadd.s32 %s31, 1
    %s33 = scalar_select %p30, %s31, %s32
    %p36 = pneg %p30
    %p37 = scmp.eq.s32.totalorder %s9, 1
    %p38 = por %p36, %p37
    %p39 = scmp.ne.s32.totalorder %s31, %s34
    %p40 = scmp.eq.s32.totalorder %s9, 0
    %p41 = por %p39, %p40
    %p42 = scmp.ne.s32.totalorder %s31, %s34
    %p43 = scmp.eq.s32.totalorder %s14, 1
    %p44 = por %p42, %p43
    %p45 = scmp.ne.s32.totalorder %s34, %s35
    %p46 = scmp.eq.s32.totalorder %s14, 0
    %p47 = por %p45, %p46
    %p48 = scmp.ne.s32.totalorder %s34, %s35
    %p49 = scmp.eq.s32.totalorder %s15, 1
    %p50 = por %p48, %p49
    %p52 = scmp.ne.s32.totalorder %s35, %s51
    %p53 = scmp.eq.s32.totalorder %s15, 0
    %p54 = por %p52, %p53
    %s55 = ssub.s32 %s17, %s24
    %p56 = scmp.eq.s32.totalorder %s55, 0
    %s58 = sadd.s32 %s57, 1
    %s59 = scalar_select %p56, %s57, %s58
    %p62 = pneg %p56
    %p63 = scmp.eq.s32.totalorder %s9, 1
    %p64 = por %p62, %p63
    %p65 = scmp.ne.s32.totalorder %s57, %s60
    %p66 = scmp.eq.s32.totalorder %s9, 0
    %p67 = por %p65, %p66
    %p68 = scmp.ne.s32.totalorder %s57, %s60
    %p69 = scmp.eq.s32.totalorder %s14, 1
    %p70 = por %p68, %p69
    %p71 = scmp.ne.s32.totalorder %s60, %s61
    %p72 = scmp.eq.s32.totalorder %s14, 0
    %p73 = por %p71, %p72
    %p74 = scmp.ne.s32.totalorder %s60, %s61
    %p75 = scmp.eq.s32.totalorder %s15, 1
    %p76 = por %p74, %p75
    %p78 = scmp.ne.s32.totalorder %s61, %s77
    %p79 = scmp.eq.s32.totalorder %s15, 0
    %p80 = por %p78, %p79
    %s81 = ssub.s32 %s17, %s24
    %p82 = scmp.eq.s32.totalorder %s81, 0
    %s84 = sadd.s32 %s83, 1
    %s85 = scalar_select %p82, %s83, %s84
    %p88 = pneg %p82
    %p89 = scmp.eq.s32.totalorder %s9, 1
    %p90 = por %p88, %p89
    %p91 = scmp.ne.s32.totalorder %s83, %s86
    %p92 = scmp.eq.s32.totalorder %s9, 0
    %p93 = por %p91, %p92
    %p94 = scmp.ne.s32.totalorder %s83, %s86
    %p95 = scmp.eq.s32.totalorder %s14, 1
    %p96 = por %p94, %p95
    %p97 = scmp.ne.s32.totalorder %s86, %s87
    %p98 = scmp.eq.s32.totalorder %s14, 0
    %p99 = por %p97, %p98
    %p100 = scmp.ne.s32.totalorder %s86, %s87
    %p101 = scmp.eq.s32.totalorder %s15, 1
    %p102 = por %p100, %p101
    %p104 = scmp.ne.s32.totalorder %s87, %s103
    %p105 = scmp.eq.s32.totalorder %s15, 0
    %p106 = por %p104, %p105
    %s107 = ssub.s32 %s16, %s28
    %s108 = ssub.s32 %s17, %s24
    %s109 = sor.u32 %s107, %s108
    %p110 = scmp.eq.s32.totalorder %s109, 0
    %s112 = sadd.s32 %s111, 1
    %s113 = scalar_select %p110, %s111, %s112
    %p116 = pneg %p110
    %p117 = scmp.eq.s32.totalorder %s9, 1
    %p118 = por %p116, %p117
    %p119 = scmp.ne.s32.totalorder %s111, %s114
    %p120 = scmp.eq.s32.totalorder %s9, 0
    %p121 = por %p119, %p120
    %p122 = scmp.ne.s32.totalorder %s111, %s114
    %p123 = scmp.eq.s32.totalorder %s14, 1
    %p124 = por %p122, %p123
    %p125 = scmp.ne.s32.totalorder %s114, %s115
    %p126 = scmp.eq.s32.totalorder %s14, 0
    %p127 = por %p125, %p126
    %p128 = scmp.ne.s32.totalorder %s114, %s115
    %p129 = scmp.eq.s32.totalorder %s15, 1
    %p130 = por %p128, %p129
    %p132 = scmp.ne.s32.totalorder %s115, %s131
    %p133 = scmp.eq.s32.totalorder %s15, 0
    %p134 = por %p132, %p133
    %p135 = scmp.le.s32.totalorder 1, %s9
    %p136 = scmp.lt.s32.totalorder %s9, 3
    %p137 = pnand %p135, %p136
    %p138 = pneg %p137
    // Predicated region
    $region9: #{conv3x3_relu.1} parent=5 // pred_check
      _
    $region10: #{conv3x3_relu.1} parent=5 // pred_check_branch
      %140 = sbr.rel (%p137) target = $region12
    $region11: #{conv3x3_relu.1} parent=5 // pred_region
      %s141 = ssub.s32 %s9, 1
      // Predicated region
      $region13: #{conv3x3_relu.1} parent=11 // pred_check
        %p142 = pneg %p73
      $region14: #{conv3x3_relu.1} parent=11 // pred_check_branch
        %144 = sbr.rel (%p142) target = $region16
      $region15: #{conv3x3_relu.1} parent=11 // pred_region
        %p145 = scmp.lt.s32.totalorder %s19, 0
        %s146 = scalar_select %p145, %s19, 0
        %s147 = smul.addr %s146, 8
        %s148 = scalar_lea.vmem %s1, %s147
      $region16: #{conv3x3_relu.1} parent=11 // pred_fallthru
        _
      // Predicated region
      $region17: #{conv3x3_relu.1} parent=11 // pred_check
        %p149 = pneg %p99
      $region18: #{conv3x3_relu.1} parent=11 // pred_check_branch
        %151 = sbr.rel (%p149) target = $region20
      $region19: #{conv3x3_relu.1} parent=11 // pred_region
        %p152 = scmp.lt.s32.totalorder %s19, 0
        %s153 = scalar_select %p152, %s19, 0
        %s154 = smul.addr %s153, 8
        %s155 = scalar_lea.vmem %s2, %s154
      $region20: #{conv3x3_relu.1} parent=11 // pred_fallthru
        _
    $region12: #{conv3x3_relu.1} parent=5 // pred_fallthru
      _
    %p156 = scmp.lt.s32.totalorder %s9, 2
    // Predicated region
    $region21: #{conv3x3_relu.1} parent=5 // pred_check
      %p157 = pneg %p156
    $region22: #{conv3x3_relu.1} parent=5 // pred_check_branch
      %159 = sbr.rel (%p157) target = $region24
    $region23: #{conv3x3_relu.1} parent=5 // pred_region
      // Predicated region
      $region25: #{conv3x3_relu.1} parent=23 // pred_check
        %p160 = pneg %p41
      $region26: #{conv3x3_relu.1} parent=23 // pred_check_branch
        %162 = sbr.rel (%p160) target = $region28
      $region27: #{conv3x3_relu.1} parent=23 // pred_region
        %p163 = scmp.lt.s32.totalorder %s16, 1
        %s164 = scalar_select %p163, %s16, 1
        %s165 = smul.addr %s164, 3
        %s166 = smul.addr %s165, 8
        %s167 = scalar_lea.vmem %s0, %s166
      $region28: #{conv3x3_relu.1} parent=23 // pred_fallthru
        _
    $region24: #{conv3x3_relu.1} parent=5 // pred_fallthru
      _
    %p168 = scmp.le.s32.totalorder 1, %s9
    %p169 = scmp.lt.s32.totalorder %s9, 3
    %p170 = pnand %p168, %p169
    %p171 = pneg %p170
    // Predicated region
    $region29: #{conv3x3_relu.1} parent=5 // pred_check
      _
    $region30: #{conv3x3_relu.1} parent=5 // pred_check_branch
      %173 = sbr.rel (%p170) target = $region32
    $region31: #{conv3x3_relu.1} parent=5 // pred_region
      %s174 = ssub.s32 %s9, 1
      %p175 = scmp.lt.s32.totalorder %s18, 1
      %s176 = scalar_select %p175, %s18, 1
      %s177 = smul.addr %s176, 3
      %s178 = smul.addr %s177, 8
      %s179 = scalar_lea.vmem %s0, %s178
      %p180 = pneg %p47
      %p181 = pneg %p44
      %p182 = scmp.lt.s32.totalorder %s19, 0
      %s183 = scalar_select %p182, %s19, 0
      %s184 = smul.addr %s183, 8
      %s185 = scalar_lea.vmem %s1, %s184
      %p186 = pneg %p73
      %p187 = pneg %p70
      %p188 = scmp.lt.s32.totalorder %s19, 0
      %s189 = scalar_select %p188, %s19, 0
      %s190 = smul.addr %s189, 8
      %s191 = scalar_lea.vmem %s2, %s190
      %p192 = pneg %p99
      %p193 = pneg %p96
      %p194 = pneg %p127
      %p195 = pneg %p124
      %p196 = scmp.lt.s32.totalorder %s18, 1
      %s197 = scalar_select %p196, %s18, 1
      %p198 = scmp.lt.s32.totalorder %s19, 0
      %s199 = scalar_select %p198, %s19, 0
      %s200 = smul.addr %s199, 3
      %s201 = smul.addr %s197, 3
      %s202 = sadd.s32 %s200, %s201
      %s203 = smul.addr %s202, 8
      %s204 = scalar_lea.vmem %s3, %s203
      %p205 = scmp.lt.s32.totalorder %s18, 1
      %s206 = scalar_select %p205, %s18, 1
      %s207 = smul.addr %s206, 3
      %s208 = smul.addr %s207, 8
      %s209 = scalar_lea.vmem %s0, %s208
      %p210 = scmp.lt.s32.totalorder %s19, 0
      %s211 = scalar_select %p210, %s19, 0
      %s212 = smul.addr %s211, 8
      %s213 = scalar_lea.vmem %s1, %s212
      %p214 = scmp.lt.s32.totalorder %s19, 0
      %s215 = scalar_select %p214, %s19, 0
      %s216 = smul.addr %s215, 8
      %s217 = scalar_lea.vmem %s2, %s216
      %p218 = scmp.lt.s32.totalorder %s18, 1
      %s219 = scalar_select %p218, %s18, 1
      %p220 = scmp.lt.s32.totalorder %s19, 0
      %s221 = scalar_select %p220, %s19, 0
      %s222 = smul.addr %s221, 3
      %s223 = smul.addr %s219, 3
      %s224 = sadd.s32 %s222, %s223
      %s225 = smul.addr %s224, 8
      %s226 = scalar_lea.vmem %s3, %s225
      %v227 = vld [vmem:[%s209] sm:$0xff]
      %v228 = vld [vmem:[%s209 + $0x8] sm:$0xff]
      %v229 = vld [vmem:[%s209 + $0x10] sm:$0xff]
      %v230 = vld [vmem:[%s213] sm:$0xff]
      %s231 = scalar_lea.vmem %s213, 8
      %v232 = vld [vmem:[%s231] sm:$0xff]
      %236 = vrot.lane.b32.xlu0 %v227, 110
      %v237 = vpop.permute.xlu0 %236
      %238 = vrot.lane.b32.xlu0 %v228, 110
      %v239 = vpop.permute.xlu0 %238
      %240 = vrot.lane.b32.xlu0 %v229, 110
      %v241 = vpop.permute.xlu0 %240
      %vm242 = vcmask 900096
      %v243 = vsel %vm242, %v237, %v239
      %v244 = vsel %vm242, %v239, %v241
      %vm248 = vcmask 64512
      %v250 = vsel %vm248, %v232, 0
      %252 = vmatpush.msra.mxu0 0.0
      %253 = vmatpush.msra.mxu0 0.0
      %254 = vmatpush.msra.mxu0 0.0
      %255 = vmatpush.msra.mxu0 0.0
      %256 = vmatpush.msra.mxu0 0.0
      %257 = vmatpush.msra.mxu0 0.0
      %258 = vmatpush.msra.mxu0 0.0
      %259 = vmatpush.msra.mxu0 0.0
      %260 = vmatpush.msra.mxu0 0.0
      %261 = vmatpush.msra.mxu0 0.0
      %262 = vmatpush.msra.mxu0 0.0
      %263 = vmatpush.msra.mxu0 0.0
      %264 = vmatpush.msra.mxu0 0.0
      %265 = vmatpush.msra.mxu0 0.0
      %266 = vmatpush.msra.mxu0 0.0
      %267 = vmatpush.msra.mxu0 %v243
      %268 = vmatmul.f32.gmra.mxu0 %v250
      %v269 = vpop.f32.mrf.mxu0
      %v270 = vadd.f32 0.0, %v269
      %271 = vdwg.mxu0
      %272 = vmatpush.msra.mxu0 0.0
      %273 = vmatpush.msra.mxu0 0.0
      %274 = vmatpush.msra.mxu0 0.0
      %275 = vmatpush.msra.mxu0 0.0
      %276 = vmatpush.msra.mxu0 0.0
      %277 = vmatpush.msra.mxu0 0.0
      %278 = vmatpush.msra.mxu0 0.0
      %279 = vmatpush.msra.mxu0 0.0
      %280 = vmatpush.msra.mxu0 0.0
      %281 = vmatpush.msra.mxu0 0.0
      %282 = vmatpush.msra.mxu0 0.0
      %283 = vmatpush.msra.mxu0 0.0
      %284 = vmatpush.msra.mxu0 0.0
      %285 = vmatpush.msra.mxu0 0.0
      %286 = vmatpush.msra.mxu0 0.0
      %287 = vmatpush.msra.mxu0 %v244
      %288 = vmatmul.f32.gmra.mxu0 %v250
      %v289 = vpop.f32.mrf.mxu0
      %v290 = vadd.f32 0.0, %v289
      %291 = vdwg.mxu0
      %292 = vmatpush.msra.mxu0 0.0
      %293 = vmatpush.msra.mxu0 0.0
      %294 = vmatpush.msra.mxu0 0.0
      %295 = vmatpush.msra.mxu0 0.0
      %296 = vmatpush.msra.mxu0 0.0
      %297 = vmatpush.msra.mxu0 0.0
      %298 = vmatpush.msra.mxu0 0.0
      %299 = vmatpush.msra.mxu0 0.0
      %300 = vmatpush.msra.mxu0 0.0
      %301 = vmatpush.msra.mxu0 0.0
      %302 = vmatpush.msra.mxu0 0.0
      %303 = vmatpush.msra.mxu0 0.0
      %304 = vmatpush.msra.mxu0 0.0
      %305 = vmatpush.msra.mxu0 0.0
      %306 = vmatpush.msra.mxu0 0.0
      %307 = vmatpush.msra.mxu0 %v241
      %308 = vmatmul.f32.gmra.mxu0 %v250
      %v309 = vpop.f32.mrf.mxu0
      %v310 = vadd.f32 0.0, %v309
      %311 = vdwg.mxu0
      %312 = vrot.lane.b32.xlu0 %v227, 111
      %v313 = vpop.permute.xlu0 %312
      %314 = vrot.lane.b32.xlu0 %v228, 111
      %v315 = vpop.permute.xlu0 %314
      %316 = vrot.lane.b32.xlu0 %v229, 111
      %v317 = vpop.permute.xlu0 %316
      %vm318 = vcmask 908288
      %v319 = vsel %vm318, %v313, %v315
      %v320 = vsel %vm318, %v315, %v317
      %v325 = vsel %vm248, %v230, 0
      %327 = vmatpush.msra.mxu0 0.0
      %328 = vmatpush.msra.mxu0 0.0
      %329 = vmatpush.msra.mxu0 0.0
      %330 = vmatpush.msra.mxu0 0.0
      %331 = vmatpush.msra.mxu0 0.0
      %332 = vmatpush.msra.mxu0 0.0
      %333 = vmatpush.msra.mxu0 0.0
      %334 = vmatpush.msra.mxu0 0.0
      %335 = vmatpush.msra.mxu0 0.0
      %336 = vmatpush.msra.mxu0 0.0
      %337 = vmatpush.msra.mxu0 0.0
      %338 = vmatpush.msra.mxu0 0.0
      %339 = vmatpush.msra.mxu0 0.0
      %340 = vmatpush.msra.mxu0 0.0
      %341 = vmatpush.msra.mxu0 0.0
      %342 = vmatpush.msra.mxu0 %v319
      %343 = vmatmul.f32.gmra.mxu0 %v325
      %v344 = vpop.f32.mrf.mxu0
      %v345 = vadd.f32 %v270, %v344
      %346 = vdwg.mxu0
      %347 = vmatpush.msra.mxu0 0.0
      %348 = vmatpush.msra.mxu0 0.0
      %349 = vmatpush.msra.mxu0 0.0
      %350 = vmatpush.msra.mxu0 0.0
      %351 = vmatpush.msra.mxu0 0.0
      %352 = vmatpush.msra.mxu0 0.0
      %353 = vmatpush.msra.mxu0 0.0
      %354 = vmatpush.msra.mxu0 0.0
      %355 = vmatpush.msra.mxu0 0.0
      %356 = vmatpush.msra.mxu0 0.0
      %357 = vmatpush.msra.mxu0 0.0
      %358 = vmatpush.msra.mxu0 0.0
      %359 = vmatpush.msra.mxu0 0.0
      %360 = vmatpush.msra.mxu0 0.0
      %361 = vmatpush.msra.mxu0 0.0
      %362 = vmatpush.msra.mxu0 %v320
      %363 = vmatmul.f32.gmra.mxu0 %v325
      %v364 = vpop.f32.mrf.mxu0
      %v365 = vadd.f32 %v290, %v364
      %366 = vdwg.mxu0
      %367 = vmatpush.msra.mxu0 0.0
      %368 = vmatpush.msra.mxu0 0.0
      %369 = vmatpush.msra.mxu0 0.0
      %370 = vmatpush.msra.mxu0 0.0
      %371 = vmatpush.msra.mxu0 0.0
      %372 = vmatpush.msra.mxu0 0.0
      %373 = vmatpush.msra.mxu0 0.0
      %374 = vmatpush.msra.mxu0 0.0
      %375 = vmatpush.msra.mxu0 0.0
      %376 = vmatpush.msra.mxu0 0.0
      %377 = vmatpush.msra.mxu0 0.0
      %378 = vmatpush.msra.mxu0 0.0
      %379 = vmatpush.msra.mxu0 0.0
      %380 = vmatpush.msra.mxu0 0.0
      %381 = vmatpush.msra.mxu0 0.0
      %382 = vmatpush.msra.mxu0 %v317
      %383 = vmatmul.f32.gmra.mxu0 %v325
      %v384 = vpop.f32.mrf.mxu0
      %v385 = vadd.f32 %v310, %v384
      %386 = vdwg.mxu0
      %s387 = scalar_lea.vmem %s213, 16
      %v388 = vld [vmem:[%s387] sm:$0xff]
      %389 = vrot.lane.b32.xlu0 %v227, 109
      %v390 = vpop.permute.xlu0 %389
      %391 = vrot.lane.b32.xlu0 %v228, 109
      %v392 = vpop.permute.xlu0 %391
      %393 = vrot.lane.b32.xlu0 %v229, 109
      %v394 = vpop.permute.xlu0 %393
      %vm395 = vcmask 891904
      %v396 = vsel %vm395, %v390, %v392
      %v397 = vsel %vm395, %v392, %v394
      %v402 = vsel %vm248, %v388, 0
      %404 = vmatpush.msra.mxu0 0.0
      %405 = vmatpush.msra.mxu0 0.0
      %406 = vmatpush.msra.mxu0 0.0
      %407 = vmatpush.msra.mxu0 0.0
      %408 = vmatpush.msra.mxu0 0.0
      %409 = vmatpush.msra.mxu0 0.0
      %410 = vmatpush.msra.mxu0 0.0
      %411 = vmatpush.msra.mxu0 0.0
      %412 = vmatpush.msra.mxu0 0.0
      %413 = vmatpush.msra.mxu0 0.0
      %414 = vmatpush.msra.mxu0 0.0
      %415 = vmatpush.msra.mxu0 0.0
      %416 = vmatpush.msra.mxu0 0.0
      %417 = vmatpush.msra.mxu0 0.0
      %418 = vmatpush.msra.mxu0 0.0
      %419 = vmatpush.msra.mxu0 %v396
      %420 = vmatmul.f32.gmra.mxu0 %v402
      %v421 = vpop.f32.mrf.mxu0
      %v422 = vadd.f32 0.0, %v421
      %423 = vdwg.mxu0
      %424 = vmatpush.msra.mxu0 0.0
      %425 = vmatpush.msra.mxu0 0.0
      %426 = vmatpush.msra.mxu0 0.0
      %427 = vmatpush.msra.mxu0 0.0
      %428 = vmatpush.msra.mxu0 0.0
      %429 = vmatpush.msra.mxu0 0.0
      %430 = vmatpush.msra.mxu0 0.0
      %431 = vmatpush.msra.mxu0 0.0
      %432 = vmatpush.msra.mxu0 0.0
      %433 = vmatpush.msra.mxu0 0.0
      %434 = vmatpush.msra.mxu0 0.0
      %435 = vmatpush.msra.mxu0 0.0
      %436 = vmatpush.msra.mxu0 0.0
      %437 = vmatpush.msra.mxu0 0.0
      %438 = vmatpush.msra.mxu0 0.0
      %439 = vmatpush.msra.mxu0 %v397
      %440 = vmatmul.f32.gmra.mxu0 %v402
      %v441 = vpop.f32.mrf.mxu0
      %v442 = vadd.f32 0.0, %v441
      %443 = vdwg.mxu0
      %444 = vmatpush.msra.mxu0 0.0
      %445 = vmatpush.msra.mxu0 0.0
      %446 = vmatpush.msra.mxu0 0.0
      %447 = vmatpush.msra.mxu0 0.0
      %448 = vmatpush.msra.mxu0 0.0
      %449 = vmatpush.msra.mxu0 0.0
      %450 = vmatpush.msra.mxu0 0.0
      %451 = vmatpush.msra.mxu0 0.0
      %452 = vmatpush.msra.mxu0 0.0
      %453 = vmatpush.msra.mxu0 0.0
      %454 = vmatpush.msra.mxu0 0.0
      %455 = vmatpush.msra.mxu0 0.0
      %456 = vmatpush.msra.mxu0 0.0
      %457 = vmatpush.msra.mxu0 0.0
      %458 = vmatpush.msra.mxu0 0.0
      %459 = vmatpush.msra.mxu0 %v394
      %460 = vmatmul.f32.gmra.mxu0 %v402
      %v461 = vpop.f32.mrf.mxu0
      %v462 = vadd.f32 0.0, %v461
      %463 = vdwg.mxu0
      %v464 = vadd.f32 %v345, %v422
      %v465 = vadd.f32 %v365, %v442
      %v466 = vadd.f32 %v385, %v462
      %s467 = scalar_lea.vmem %s213, 24
      %v468 = vld [vmem:[%s467] sm:$0xff]
      %469 = vrot.lane.b32.xlu0 %v227, 93
      %v470 = vpop.permute.xlu0 %469
      %471 = vrot.lane.b32.xlu0 %v228, 93
      %v472 = vpop.permute.xlu0 %471
      %473 = vrot.lane.b32.xlu0 %v229, 93
      %v474 = vpop.permute.xlu0 %473
      %vm475 = vcmask 760832
      %v476 = vsel %vm475, %v470, %v472
      %v477 = vsel %vm475, %v472, %v474
      %v482 = vsel %vm248, %v468, 0
      %484 = vmatpush.msra.mxu0 0.0
      %485 = vmatpush.msra.mxu0 0.0
      %486 = vmatpush.msra.mxu0 0.0
      %487 = vmatpush.msra.mxu0 0.0
      %488 = vmatpush.msra.mxu0 0.0
      %489 = vmatpush.msra.mxu0 0.0
      %490 = vmatpush.msra.mxu0 0.0
      %491 = vmatpush.msra.mxu0 0.0
      %492 = vmatpush.msra.mxu0 0.0
      %493 = vmatpush.msra.mxu0 0.0
      %494 = vmatpush.msra.mxu0 0.0
      %495 = vmatpush.msra.mxu0 0.0
      %496 = vmatpush.msra.mxu0 0.0
      %497 = vmatpush.msra.mxu0 0.0
      %498 = vmatpush.msra.mxu0 0.0
      %499 = vmatpush.msra.mxu0 %v476
      %500 = vmatmul.f32.gmra.mxu0 %v482
      %v501 = vpop.f32.mrf.mxu0
      %v502 = vadd.f32 0.0, %v501
      %503 = vdwg.mxu0
      %504 = vmatpush.msra.mxu0 0.0
      %505 = vmatpush.msra.mxu0 0.0
      %506 = vmatpush.msra.mxu0 0.0
      %507 = vmatpush.msra.mxu0 0.0
      %508 = vmatpush.msra.mxu0 0.0
      %509 = vmatpush.msra.mxu0 0.0
      %510 = vmatpush.msra.mxu0 0.0
      %511 = vmatpush.msra.mxu0 0.0
      %512 = vmatpush.msra.mxu0 0.0
      %513 = vmatpush.msra.mxu0 0.0
      %514 = vmatpush.msra.mxu0 0.0
      %515 = vmatpush.msra.mxu0 0.0
      %516 = vmatpush.msra.mxu0 0.0
      %517 = vmatpush.msra.mxu0 0.0
      %518 = vmatpush.msra.mxu0 0.0
      %519 = vmatpush.msra.mxu0 %v477
      %520 = vmatmul.f32.gmra.mxu0 %v482
      %v521 = vpop.f32.mrf.mxu0
      %v522 = vadd.f32 0.0, %v521
      %523 = vdwg.mxu0
      %524 = vmatpush.msra.mxu0 0.0
      %525 = vmatpush.msra.mxu0 0.0
      %526 = vmatpush.msra.mxu0 0.0
      %527 = vmatpush.msra.mxu0 0.0
      %528 = vmatpush.msra.mxu0 0.0
      %529 = vmatpush.msra.mxu0 0.0
      %530 = vmatpush.msra.mxu0 0.0
      %531 = vmatpush.msra.mxu0 0.0
      %532 = vmatpush.msra.mxu0 0.0
      %533 = vmatpush.msra.mxu0 0.0
      %534 = vmatpush.msra.mxu0 0.0
      %535 = vmatpush.msra.mxu0 0.0
      %536 = vmatpush.msra.mxu0 0.0
      %537 = vmatpush.msra.mxu0 0.0
      %538 = vmatpush.msra.mxu0 0.0
      %539 = vmatpush.msra.mxu0 %v474
      %540 = vmatmul.f32.gmra.mxu0 %v482
      %v541 = vpop.f32.mrf.mxu0
      %v542 = vadd.f32 0.0, %v541
      %543 = vdwg.mxu0
      %v544 = vadd.f32 %v464, %v502
      %v545 = vadd.f32 %v465, %v522
      %v546 = vadd.f32 %v466, %v542
      %s547 = scalar_lea.vmem %s213, 32
      %v548 = vld [vmem:[%s547] sm:$0xff]
      %549 = vrot.lane.b32.xlu0 %v227, 92
      %v550 = vpop.permute.xlu0 %549
      %551 = vrot.lane.b32.xlu0 %v228, 92
      %v552 = vpop.permute.xlu0 %551
      %553 = vrot.lane.b32.xlu0 %v229, 92
      %v554 = vpop.permute.xlu0 %553
      %vm555 = vcmask 752640
      %v556 = vsel %vm555, %v550, %v552
      %v557 = vsel %vm555, %v552, %v554
      %v562 = vsel %vm248, %v548, 0
      %564 = vmatpush.msra.mxu0 0.0
      %565 = vmatpush.msra.mxu0 0.0
      %566 = vmatpush.msra.mxu0 0.0
      %567 = vmatpush.msra.mxu0 0.0
      %568 = vmatpush.msra.mxu0 0.0
      %569 = vmatpush.msra.mxu0 0.0
      %570 = vmatpush.msra.mxu0 0.0
      %571 = vmatpush.msra.mxu0 0.0
      %572 = vmatpush.msra.mxu0 0.0
      %573 = vmatpush.msra.mxu0 0.0
      %574 = vmatpush.msra.mxu0 0.0
      %575 = vmatpush.msra.mxu0 0.0
      %576 = vmatpush.msra.mxu0 0.0
      %577 = vmatpush.msra.mxu0 0.0
      %578 = vmatpush.msra.mxu0 0.0
      %579 = vmatpush.msra.mxu0 %v556
      %580 = vmatmul.f32.gmra.mxu0 %v562
      %v581 = vpop.f32.mrf.mxu0
      %v582 = vadd.f32 0.0, %v581
      %583 = vdwg.mxu0
      %584 = vmatpush.msra.mxu0 0.0
      %585 = vmatpush.msra.mxu0 0.0
      %586 = vmatpush.msra.mxu0 0.0
      %587 = vmatpush.msra.mxu0 0.0
      %588 = vmatpush.msra.mxu0 0.0
      %589 = vmatpush.msra.mxu0 0.0
      %590 = vmatpush.msra.mxu0 0.0
      %591 = vmatpush.msra.mxu0 0.0
      %592 = vmatpush.msra.mxu0 0.0
      %593 = vmatpush.msra.mxu0 0.0
      %594 = vmatpush.msra.mxu0 0.0
      %595 = vmatpush.msra.mxu0 0.0
      %596 = vmatpush.msra.mxu0 0.0
      %597 = vmatpush.msra.mxu0 0.0
      %598 = vmatpush.msra.mxu0 0.0
      %599 = vmatpush.msra.mxu0 %v557
      %600 = vmatmul.f32.gmra.mxu0 %v562
      %v601 = vpop.f32.mrf.mxu0
      %v602 = vadd.f32 0.0, %v601
      %603 = vdwg.mxu0
      %604 = vmatpush.msra.mxu0 0.0
      %605 = vmatpush.msra.mxu0 0.0
      %606 = vmatpush.msra.mxu0 0.0
      %607 = vmatpush.msra.mxu0 0.0
      %608 = vmatpush.msra.mxu0 0.0
      %609 = vmatpush.msra.mxu0 0.0
      %610 = vmatpush.msra.mxu0 0.0
      %611 = vmatpush.msra.mxu0 0.0
      %612 = vmatpush.msra.mxu0 0.0
      %613 = vmatpush.msra.mxu0 0.0
      %614 = vmatpush.msra.mxu0 0.0
      %615 = vmatpush.msra.mxu0 0.0
      %616 = vmatpush.msra.mxu0 0.0
      %617 = vmatpush.msra.mxu0 0.0
      %618 = vmatpush.msra.mxu0 0.0
      %619 = vmatpush.msra.mxu0 %v554
      %620 = vmatmul.f32.gmra.mxu0 %v562
      %v621 = vpop.f32.mrf.mxu0
      %v622 = vadd.f32 0.0, %v621
      %623 = vdwg.mxu0
      %v624 = vadd.f32 %v544, %v582
      %v625 = vadd.f32 %v545, %v602
      %v626 = vadd.f32 %v546, %v622
      %s627 = scalar_lea.vmem %s213, 40
      %v628 = vld [vmem:[%s627] sm:$0xff]
      %629 = vrot.lane.b32.xlu0 %v227, 91
      %v630 = vpop.permute.xlu0 %629
      %631 = vrot.lane.b32.xlu0 %v228, 91
      %v632 = vpop.permute.xlu0 %631
      %633 = vrot.lane.b32.xlu0 %v229, 91
      %v634 = vpop.permute.xlu0 %633
      %vm635 = vcmask 744448
      %v636 = vsel %vm635, %v630, %v632
      %v637 = vsel %vm635, %v632, %v634
      %v642 = vsel %vm248, %v628, 0
      %644 = vmatpush.msra.mxu0 0.0
      %645 = vmatpush.msra.mxu0 0.0
      %646 = vmatpush.msra.mxu0 0.0
      %647 = vmatpush.msra.mxu0 0.0
      %648 = vmatpush.msra.mxu0 0.0
      %649 = vmatpush.msra.mxu0 0.0
      %650 = vmatpush.msra.mxu0 0.0
      %651 = vmatpush.msra.mxu0 0.0
      %652 = vmatpush.msra.mxu0 0.0
      %653 = vmatpush.msra.mxu0 0.0
      %654 = vmatpush.msra.mxu0 0.0
      %655 = vmatpush.msra.mxu0 0.0
      %656 = vmatpush.msra.mxu0 0.0
      %657 = vmatpush.msra.mxu0 0.0
      %658 = vmatpush.msra.mxu0 0.0
      %659 = vmatpush.msra.mxu0 %v636
      %660 = vmatmul.f32.gmra.mxu0 %v642
      %v661 = vpop.f32.mrf.mxu0
      %v662 = vadd.f32 0.0, %v661
      %663 = vdwg.mxu0
      %664 = vmatpush.msra.mxu0 0.0
      %665 = vmatpush.msra.mxu0 0.0
      %666 = vmatpush.msra.mxu0 0.0
      %667 = vmatpush.msra.mxu0 0.0
      %668 = vmatpush.msra.mxu0 0.0
      %669 = vmatpush.msra.mxu0 0.0
      %670 = vmatpush.msra.mxu0 0.0
      %671 = vmatpush.msra.mxu0 0.0
      %672 = vmatpush.msra.mxu0 0.0
      %673 = vmatpush.msra.mxu0 0.0
      %674 = vmatpush.msra.mxu0 0.0
      %675 = vmatpush.msra.mxu0 0.0
      %676 = vmatpush.msra.mxu0 0.0
      %677 = vmatpush.msra.mxu0 0.0
      %678 = vmatpush.msra.mxu0 0.0
      %679 = vmatpush.msra.mxu0 %v637
      %680 = vmatmul.f32.gmra.mxu0 %v642
      %v681 = vpop.f32.mrf.mxu0
      %v682 = vadd.f32 0.0, %v681
      %683 = vdwg.mxu0
      %684 = vmatpush.msra.mxu0 0.0
      %685 = vmatpush.msra.mxu0 0.0
      %686 = vmatpush.msra.mxu0 0.0
      %687 = vmatpush.msra.mxu0 0.0
      %688 = vmatpush.msra.mxu0 0.0
      %689 = vmatpush.msra.mxu0 0.0
      %690 = vmatpush.msra.mxu0 0.0
      %691 = vmatpush.msra.mxu0 0.0
      %692 = vmatpush.msra.mxu0 0.0
      %693 = vmatpush.msra.mxu0 0.0
      %694 = vmatpush.msra.mxu0 0.0
      %695 = vmatpush.msra.mxu0 0.0
      %696 = vmatpush.msra.mxu0 0.0
      %697 = vmatpush.msra.mxu0 0.0
      %698 = vmatpush.msra.mxu0 0.0
      %699 = vmatpush.msra.mxu0 %v634
      %700 = vmatmul.f32.gmra.mxu0 %v642
      %v701 = vpop.f32.mrf.mxu0
      %v702 = vadd.f32 0.0, %v701
      %703 = vdwg.mxu0
      %v704 = vadd.f32 %v624, %v662
      %v705 = vadd.f32 %v625, %v682
      %v706 = vadd.f32 %v626, %v702
      %s707 = scalar_lea.vmem %s213, 48
      %v708 = vld [vmem:[%s707] sm:$0xff]
      %709 = vrot.lane.b32.xlu0 %v227, 75
      %v710 = vpop.permute.xlu0 %709
      %711 = vrot.lane.b32.xlu0 %v228, 75
      %v712 = vpop.permute.xlu0 %711
      %713 = vrot.lane.b32.xlu0 %v229, 75
      %v714 = vpop.permute.xlu0 %713
      %vm715 = vcmask 613376
      %v716 = vsel %vm715, %v710, %v712
      %v717 = vsel %vm715, %v712, %v714
      %v722 = vsel %vm248, %v708, 0
      %724 = vmatpush.msra.mxu0 0.0
      %725 = vmatpush.msra.mxu0 0.0
      %726 = vmatpush.msra.mxu0 0.0
      %727 = vmatpush.msra.mxu0 0.0
      %728 = vmatpush.msra.mxu0 0.0
      %729 = vmatpush.msra.mxu0 0.0
      %730 = vmatpush.msra.mxu0 0.0
      %731 = vmatpush.msra.mxu0 0.0
      %732 = vmatpush.msra.mxu0 0.0
      %733 = vmatpush.msra.mxu0 0.0
      %734 = vmatpush.msra.mxu0 0.0
      %735 = vmatpush.msra.mxu0 0.0
      %736 = vmatpush.msra.mxu0 0.0
      %737 = vmatpush.msra.mxu0 0.0
      %738 = vmatpush.msra.mxu0 0.0
      %739 = vmatpush.msra.mxu0 %v716
      %740 = vmatmul.f32.gmra.mxu0 %v722
      %v741 = vpop.f32.mrf.mxu0
      %v742 = vadd.f32 0.0, %v741
      %743 = vdwg.mxu0
      %744 = vmatpush.msra.mxu0 0.0
      %745 = vmatpush.msra.mxu0 0.0
      %746 = vmatpush.msra.mxu0 0.0
      %747 = vmatpush.msra.mxu0 0.0
      %748 = vmatpush.msra.mxu0 0.0
      %749 = vmatpush.msra.mxu0 0.0
      %750 = vmatpush.msra.mxu0 0.0
      %751 = vmatpush.msra.mxu0 0.0
      %752 = vmatpush.msra.mxu0 0.0
      %753 = vmatpush.msra.mxu0 0.0
      %754 = vmatpush.msra.mxu0 0.0
      %755 = vmatpush.msra.mxu0 0.0
      %756 = vmatpush.msra.mxu0 0.0
      %757 = vmatpush.msra.mxu0 0.0
      %758 = vmatpush.msra.mxu0 0.0
      %759 = vmatpush.msra.mxu0 %v717
      %760 = vmatmul.f32.gmra.mxu0 %v722
      %v761 = vpop.f32.mrf.mxu0
      %v762 = vadd.f32 0.0, %v761
      %763 = vdwg.mxu0
      %764 = vmatpush.msra.mxu0 0.0
      %765 = vmatpush.msra.mxu0 0.0
      %766 = vmatpush.msra.mxu0 0.0
      %767 = vmatpush.msra.mxu0 0.0
      %768 = vmatpush.msra.mxu0 0.0
      %769 = vmatpush.msra.mxu0 0.0
      %770 = vmatpush.msra.mxu0 0.0
      %771 = vmatpush.msra.mxu0 0.0
      %772 = vmatpush.msra.mxu0 0.0
      %773 = vmatpush.msra.mxu0 0.0
      %774 = vmatpush.msra.mxu0 0.0
      %775 = vmatpush.msra.mxu0 0.0
      %776 = vmatpush.msra.mxu0 0.0
      %777 = vmatpush.msra.mxu0 0.0
      %778 = vmatpush.msra.mxu0 0.0
      %779 = vmatpush.msra.mxu0 %v714
      %780 = vmatmul.f32.gmra.mxu0 %v722
      %v781 = vpop.f32.mrf.mxu0
      %v782 = vadd.f32 0.0, %v781
      %783 = vdwg.mxu0
      %v784 = vadd.f32 %v704, %v742
      %v785 = vadd.f32 %v705, %v762
      %v786 = vadd.f32 %v706, %v782
      %s787 = scalar_lea.vmem %s213, 56
      %v788 = vld [vmem:[%s787] sm:$0xff]
      %789 = vrot.lane.b32.xlu0 %v227, 74
      %v790 = vpop.permute.xlu0 %789
      %791 = vrot.lane.b32.xlu0 %v228, 74
      %v792 = vpop.permute.xlu0 %791
      %793 = vrot.lane.b32.xlu0 %v229, 74
      %v794 = vpop.permute.xlu0 %793
      %vm795 = vcmask 605184
      %v796 = vsel %vm795, %v790, %v792
      %v797 = vsel %vm795, %v792, %v794
      %v802 = vsel %vm248, %v788, 0
      %804 = vmatpush.msra.mxu0 0.0
      %805 = vmatpush.msra.mxu0 0.0
      %806 = vmatpush.msra.mxu0 0.0
      %807 = vmatpush.msra.mxu0 0.0
      %808 = vmatpush.msra.mxu0 0.0
      %809 = vmatpush.msra.mxu0 0.0
      %810 = vmatpush.msra.mxu0 0.0
      %811 = vmatpush.msra.mxu0 0.0
      %812 = vmatpush.msra.mxu0 0.0
      %813 = vmatpush.msra.mxu0 0.0
      %814 = vmatpush.msra.mxu0 0.0
      %815 = vmatpush.msra.mxu0 0.0
      %816 = vmatpush.msra.mxu0 0.0
      %817 = vmatpush.msra.mxu0 0.0
      %818 = vmatpush.msra.mxu0 0.0
      %819 = vmatpush.msra.mxu0 %v796
      %820 = vmatmul.f32.gmra.mxu0 %v802
      %v821 = vpop.f32.mrf.mxu0
      %v822 = vadd.f32 0.0, %v821
      %823 = vdwg.mxu0
      %824 = vmatpush.msra.mxu0 0.0
      %825 = vmatpush.msra.mxu0 0.0
      %826 = vmatpush.msra.mxu0 0.0
      %827 = vmatpush.msra.mxu0 0.0
      %828 = vmatpush.msra.mxu0 0.0
      %829 = vmatpush.msra.mxu0 0.0
      %830 = vmatpush.msra.mxu0 0.0
      %831 = vmatpush.msra.mxu0 0.0
      %832 = vmatpush.msra.mxu0 0.0
      %833 = vmatpush.msra.mxu0 0.0
      %834 = vmatpush.msra.mxu0 0.0
      %835 = vmatpush.msra.mxu0 0.0
      %836 = vmatpush.msra.mxu0 0.0
      %837 = vmatpush.msra.mxu0 0.0
      %838 = vmatpush.msra.mxu0 0.0
      %839 = vmatpush.msra.mxu0 %v797
      %840 = vmatmul.f32.gmra.mxu0 %v802
      %v841 = vpop.f32.mrf.mxu0
      %v842 = vadd.f32 0.0, %v841
      %843 = vdwg.mxu0
      %844 = vmatpush.msra.mxu0 0.0
      %845 = vmatpush.msra.mxu0 0.0
      %846 = vmatpush.msra.mxu0 0.0
      %847 = vmatpush.msra.mxu0 0.0
      %848 = vmatpush.msra.mxu0 0.0
      %849 = vmatpush.msra.mxu0 0.0
      %850 = vmatpush.msra.mxu0 0.0
      %851 = vmatpush.msra.mxu0 0.0
      %852 = vmatpush.msra.mxu0 0.0
      %853 = vmatpush.msra.mxu0 0.0
      %854 = vmatpush.msra.mxu0 0.0
      %855 = vmatpush.msra.mxu0 0.0
      %856 = vmatpush.msra.mxu0 0.0
      %857 = vmatpush.msra.mxu0 0.0
      %858 = vmatpush.msra.mxu0 0.0
      %859 = vmatpush.msra.mxu0 %v794
      %860 = vmatmul.f32.gmra.mxu0 %v802
      %v861 = vpop.f32.mrf.mxu0
      %v862 = vadd.f32 0.0, %v861
      %863 = vdwg.mxu0
      %v864 = vadd.f32 %v784, %v822
      %v865 = vadd.f32 %v785, %v842
      %v866 = vadd.f32 %v786, %v862
      %s867 = scalar_lea.vmem %s213, 64
      %v868 = vld [vmem:[%s867] sm:$0xff]
      %869 = vrot.lane.b32.xlu0 %v227, 73
      %v870 = vpop.permute.xlu0 %869
      %871 = vrot.lane.b32.xlu0 %v228, 73
      %v872 = vpop.permute.xlu0 %871
      %873 = vrot.lane.b32.xlu0 %v229, 73
      %v874 = vpop.permute.xlu0 %873
      %vm875 = vcmask 596992
      %v876 = vsel %vm875, %v870, %v872
      %v877 = vsel %vm875, %v872, %v874
      %v882 = vsel %vm248, %v868, 0
      %884 = vmatpush.msra.mxu0 0.0
      %885 = vmatpush.msra.mxu0 0.0
      %886 = vmatpush.msra.mxu0 0.0
      %887 = vmatpush.msra.mxu0 0.0
      %888 = vmatpush.msra.mxu0 0.0
      %889 = vmatpush.msra.mxu0 0.0
      %890 = vmatpush.msra.mxu0 0.0
      %891 = vmatpush.msra.mxu0 0.0
      %892 = vmatpush.msra.mxu0 0.0
      %893 = vmatpush.msra.mxu0 0.0
      %894 = vmatpush.msra.mxu0 0.0
      %895 = vmatpush.msra.mxu0 0.0
      %896 = vmatpush.msra.mxu0 0.0
      %897 = vmatpush.msra.mxu0 0.0
      %898 = vmatpush.msra.mxu0 0.0
      %899 = vmatpush.msra.mxu0 %v876
      %900 = vmatmul.f32.gmra.mxu0 %v882
      %v901 = vpop.f32.mrf.mxu0
      %v902 = vadd.f32 0.0, %v901
      %903 = vdwg.mxu0
      %904 = vmatpush.msra.mxu0 0.0
      %905 = vmatpush.msra.mxu0 0.0
      %906 = vmatpush.msra.mxu0 0.0
      %907 = vmatpush.msra.mxu0 0.0
      %908 = vmatpush.msra.mxu0 0.0
      %909 = vmatpush.msra.mxu0 0.0
      %910 = vmatpush.msra.mxu0 0.0
      %911 = vmatpush.msra.mxu0 0.0
      %912 = vmatpush.msra.mxu0 0.0
      %913 = vmatpush.msra.mxu0 0.0
      %914 = vmatpush.msra.mxu0 0.0
      %915 = vmatpush.msra.mxu0 0.0
      %916 = vmatpush.msra.mxu0 0.0
      %917 = vmatpush.msra.mxu0 0.0
      %918 = vmatpush.msra.mxu0 0.0
      %919 = vmatpush.msra.mxu0 %v877
      %920 = vmatmul.f32.gmra.mxu0 %v882
      %v921 = vpop.f32.mrf.mxu0
      %v922 = vadd.f32 0.0, %v921
      %923 = vdwg.mxu0
      %924 = vmatpush.msra.mxu0 0.0
      %925 = vmatpush.msra.mxu0 0.0
      %926 = vmatpush.msra.mxu0 0.0
      %927 = vmatpush.msra.mxu0 0.0
      %928 = vmatpush.msra.mxu0 0.0
      %929 = vmatpush.msra.mxu0 0.0
      %930 = vmatpush.msra.mxu0 0.0
      %931 = vmatpush.msra.mxu0 0.0
      %932 = vmatpush.msra.mxu0 0.0
      %933 = vmatpush.msra.mxu0 0.0
      %934 = vmatpush.msra.mxu0 0.0
      %935 = vmatpush.msra.mxu0 0.0
      %936 = vmatpush.msra.mxu0 0.0
      %937 = vmatpush.msra.mxu0 0.0
      %938 = vmatpush.msra.mxu0 0.0
      %939 = vmatpush.msra.mxu0 %v874
      %940 = vmatmul.f32.gmra.mxu0 %v882
      %v941 = vpop.f32.mrf.mxu0
      %v942 = vadd.f32 0.0, %v941
      %943 = vdwg.mxu0
      %v944 = vadd.f32 %v864, %v902
      %v945 = vadd.f32 %v865, %v922
      %v946 = vadd.f32 %v866, %v942
      %v947 = vld [vmem:[%s217] sm:$0xff]
      %949 = vset.pattern.permute.xlu0 0
      %950 = vperm.xlu0 %949, %v947
      %v951 = vpop.permute.xlu0 %950
      %v953 = vadd.f32 %v944, %v951
      %v954 = vadd.f32 %v945, %v951
      %v955 = vadd.f32 %v946, %v951
      %v956 = vmax.f32 %v953, 0.0
      %v957 = vmax.f32 %v954, 0.0
      %v958 = vmax.f32 %v955, 0.0
      %959 = vst [vmem:[%s226] sm:$0xff] %v956
      %960 = vst [vmem:[%s226 + $0x8] sm:$0xff] %v957
      %vm961 = vcmask 261120
      %962 = vst.msk [vmem:[%s226 + $0x10] sm:$0xff] %vm961, %v958
      %p963 = scmp.lt.s32.totalorder %s18, 1
      %s964 = scalar_select %p963, %s18, 1
      %p965 = scmp.lt.s32.totalorder %s19, 0
      %s966 = scalar_select %p965, %s19, 0
      %s967 = smul.addr %s966, 3
      %s968 = smul.addr %s964, 3
      %s969 = sadd.s32 %s967, %s968
      %s970 = smul.addr %s969, 8
      %s971 = scalar_lea.vmem %s3, %s970
      // Predicated region
      $region33: #{conv3x3_relu.1} parent=31 // pred_check
        %p972 = pneg %p124
      $region34: #{conv3x3_relu.1} parent=31 // pred_check_branch
        %974 = sbr.rel (%p972) target = $region36
      $region35: #{conv3x3_relu.1} parent=31 // pred_region
        _
      $region36: #{conv3x3_relu.1} parent=31 // pred_fallthru
        _
    $region32: #{conv3x3_relu.1} parent=5 // pred_fallthru
      _
    %p975 = scmp.le.s32.totalorder 2, %s9
    // Predicated region
    $region37: #{conv3x3_relu.1} parent=5 // pred_check
      %p976 = pneg %p975
    $region38: #{conv3x3_relu.1} parent=5 // pred_check_branch
      %978 = sbr.rel (%p976) target = $region40
    $region39: #{conv3x3_relu.1} parent=5 // pred_region
      %s979 = ssub.s32 %s9, 2
      // Predicated region
      $region41: #{conv3x3_relu.1} parent=39 // pred_check
        %p980 = pneg %p130
      $region42: #{conv3x3_relu.1} parent=39 // pred_check_branch
        %982 = sbr.rel (%p980) target = $region44
      $region43: #{conv3x3_relu.1} parent=39 // pred_region
        %p983 = scmp.lt.s32.totalorder %s20, 1
        %s984 = scalar_select %p983, %s20, 1
        %p985 = scmp.lt.s32.totalorder %s21, 0
        %s986 = scalar_select %p985, %s21, 0
        %s987 = smul.addr %s986, 3
        %s988 = smul.addr %s984, 3
        %s989 = sadd.s32 %s987, %s988
        %s990 = smul.addr %s989, 8
        %s991 = scalar_lea.vmem %s3, %s990
      $region44: #{conv3x3_relu.1} parent=39 // pred_fallthru
        _
    $region40: #{conv3x3_relu.1} parent=5 // pred_fallthru
      _
  $region6: #{conv3x3_relu.1} parent=0 // loop_footer
    %s13 = sadd.s32 1, %s9
  $region7: #{conv3x3_relu.1} parent=0 // loop_footer_branch
    %8 = sbr.rel target = $region3
  $region8: #{conv3x3_relu.1} parent=0 // loop_exit
    _

</llo_original>
